<compile_context>
chip_gen: v7x
topology: tpu7x:2x2x1
jax: 0.10.0
libtpu: 0.0.40
codegen_flags: <defaults>
</compile_context>

<pallas_src>
import jax
import jax.numpy as jnp
from jax.experimental import pallas as pl
from jax.experimental.pallas import tpu as pltpu


# --------------------------------------------------------------------------- kernels


def _final_sigmoid_kernel(w_ref, x_ref, o_ref):
    # w_ref: SMEM (1, C) f32   x_ref: VMEM (C, TP) f32   o_ref: VMEM (1, TP) f32
    c = x_ref.shape[0]
    logits = w_ref[0, 0] * x_ref[0:1, :]
    for ci in range(1, c):
        logits = logits + w_ref[0, ci] * x_ref[ci:ci + 1, :]
    o_ref[...] = jax.nn.sigmoid(logits).astype(o_ref.dtype)


def _final_argmax_kernel(w_ref, x_ref, o_ref):
    # w_ref: SMEM (K, C) f32   x_ref: VMEM (C, TP) f32   o_ref: VMEM (1, TP) i32
    k, c = w_ref.shape

    def logits_for_class(ki):
        acc = w_ref[ki, 0] * x_ref[0:1, :]
        for ci in range(1, c):
            acc = acc + w_ref[ki, ci] * x_ref[ci:ci + 1, :]
        return acc  # (1, TP) f32

    # argmax(softmax(z)) == argmax(z): running first-max (strict '>' keeps the
    # earliest class index on exact ties, matching torch/jnp argmax semantics).
    best_val = logits_for_class(0)
    best_idx = jnp.zeros(best_val.shape, dtype=jnp.int32)
    for ki in range(1, k):
        lv = logits_for_class(ki)
        better = lv > best_val
        best_val = jnp.where(better, lv, best_val)
        best_idx = jnp.where(better, jnp.int32(ki), best_idx)
    o_ref[...] = best_idx


# --------------------------------------------------------------------------- wrapper


def _choose_tile_p(hw, c, *, target=8192, vmem_budget=12 << 20):
    """Pick a large pixel tile (lane axis): a multiple of 128 (or the full row)
    that keeps the double-buffered working set well inside scoped VMEM on all
    of v5e/v6e/v7x."""
    bytes_per_lane = 4 * (c + 2)  # f32 x rows + out + slack, per lane
    cap = max(128, (vmem_budget // (2 * bytes_per_lane)) // 128 * 128)
    target = min(target, cap)
    if hw <= target:
        return hw  # a single full-row tile is always a legal block shape
    if hw % 128 == 0:
        t = (target // 128) * 128
        while t >= 128:
            if hw % t == 0:
                return t
            t -= 128
    # no clean divisor: use the target tile and pad the pixel axis
    return (target // 128) * 128


def final_forward(img_in, weight, num_class, *, tile_p=None):
    """Reproduces Final.forward.

    img_in : (N, C, H, W) float32   (NCHW, like PyTorch)
    weight : (K, C) float32, K = 1 if num_class == 2 else num_class
             (1x1 conv weight with the trailing 1x1 dims squeezed)

    returns (N, 1, H, W):
      num_class == 2  -> float32 sigmoid probabilities
      num_class  > 2  -> int32 argmax class indices
    """
    n, c, h, w = img_in.shape
    k = weight.shape[0]
    hw = h * w

    if tile_p is None:
        tile_p = _choose_tile_p(hw, c)
    hw_pad = pl.cdiv(hw, tile_p) * tile_p

    x = img_in.reshape(n, c, hw)  # free: no transpose, no copy
    if hw_pad != hw:
        # TODO(synk): handle the ragged last tile with a masked write instead of
        # this pad copy (only triggers when H*W has no multiple-of-128 divisor).
        x = jnp.pad(x, ((0, 0), (0, 0), (0, hw_pad - hw)))

    if num_class == 2:
        kernel = _final_sigmoid_kernel
        out_dtype = jnp.float32
        transcendentals = n * hw
    else:
        kernel = _final_argmax_kernel
        out_dtype = jnp.int32  # torch argmax returns int64; int32 suffices here
        transcendentals = 0

    grid = (n, hw_pad // tile_p)

    cost = pl.CostEstimate(
        flops=2 * k * c * n * hw,
        transcendentals=transcendentals,
        bytes_accessed=4 * c * n * hw + 4 * k * c + 4 * n * hw,
    )

    out = pl.pallas_call(
        kernel,
        out_shape=jax.ShapeDtypeStruct((n, 1, hw_pad), out_dtype),
        grid=grid,
        in_specs=[
            # (K, C) weight: whole array, resident in SMEM (scalar reads only)
            pl.BlockSpec(memory_space=pltpu.MemorySpace.SMEM),
            # (N, C, HW): one batch element, full channel dim, a pixel tile
            pl.BlockSpec((pl.Squeezed(), c, tile_p), lambda b, i: (b, 0, i)),
        ],
        out_specs=pl.BlockSpec((pl.Squeezed(), 1, tile_p), lambda b, i: (b, 0, i)),
        compiler_params=pltpu.CompilerParams(
            dimension_semantics=("parallel", "parallel")),
        cost_estimate=cost,
    )(weight, x)

    out = out[:, :, :hw].reshape(n, 1, h, w)  # slice is a no-op when hw_pad == hw
    return out


# --------------------------------------------------------------------------- demo


def _make_weight(key, num_class, filters):
    k = num_class - 1 if num_class == 2 else num_class
    # (K, C) == Conv2d(filters, K, kernel_size=1, bias=False).weight[:, :, 0, 0]
    return jax.random.normal(key, (k, filters), dtype=jnp.float32) * 0.1


if __name__ == "__main__":
    key = jax.random.PRNGKey(0)
    k_x, k_w2, k_wm = jax.random.split(key, 3)

    N, C, H, W = 2, 4, 16, 16
    x = jax.random.normal(k_x, (N, C, H, W), dtype=jnp.float32)

    # --- branch 1: num_class == 2 (1x1 conv -> sigmoid) ---
    w2 = _make_weight(k_w2, num_class=2, filters=C)
    out2 = jax.block_until_ready(final_forward(x, w2, num_class=2))
    assert out2.shape == (N, 1, H, W) and out2.dtype == jnp.float32

    ref2 = jax.nn.sigmoid(jnp.einsum("kc,nchw->nkhw", w2, x))
    assert jnp.allclose(out2, ref2, atol=1e-5), "sigmoid branch mismatch"

    # --- branch 2: num_class > 2 (1x1 conv -> softmax2d -> argmax over channels) ---
    NUM_CLASS = 5
    wm = _make_weight(k_wm, num_class=NUM_CLASS, filters=C)
    outm = jax.block_until_ready(final_forward(x, wm, num_class=NUM_CLASS))
    assert outm.shape == (N, 1, H, W) and outm.dtype == jnp.int32

    refm = jnp.argmax(
        jax.nn.softmax(jnp.einsum("kc,nchw->nkhw", wm, x), axis=1), axis=1
    )[:, None].astype(jnp.int32)
    assert jnp.array_equal(outm, refm), "argmax branch mismatch"

    print("KERNEL_OK")
</pallas_src>

<mosaic_0001>
module attributes {stable_mosaic.version = 11 : i64} {
  func.func @_final_sigmoid_kernel(%arg0: i32, %arg1: i32, %arg2: memref<1x4xf32, #tpu.memory_space<smem>>, %arg3: memref<1x4x256xf32, #tpu.memory_space<vmem>>, %arg4: memref<1x1x256xf32, #tpu.memory_space<vmem>>) attributes {dimension_semantics = [#tpu.dimension_semantics<parallel>, #tpu.dimension_semantics<parallel>], iteration_bounds = array<i64: 2, 1>, scalar_prefetch = 0 : i64, scratch_operands = 0 : i64, tpu.core_type = #tpu.core_type<tc>, window_params = [{transform_indices = @transform_0, window_bounds = array<i64: 1, 4>}, {transform_indices = @transform_1, window_bounds = array<i64: 1, 4, 256>}, {transform_indices = @transform_2, window_bounds = array<i64: 1, 1, 256>}]} {
    %c0 = arith.constant 0 : index
    %c0_0 = arith.constant 0 : index
    %0 = memref.load %arg2[%c0, %c0_0] : memref<1x4xf32, #tpu.memory_space<smem>>
    %c0_1 = arith.constant 0 : index
    %c0_2 = arith.constant 0 : index
    %c0_3 = arith.constant 0 : index
    %1 = vector.load %arg3[%c0_1, %c0_2, %c0_3] : memref<1x4x256xf32, #tpu.memory_space<vmem>>, vector<1x1x256xf32>
    %2 = vector.shape_cast %1 : vector<1x1x256xf32> to vector<1x256xf32>
    %3 = vector.broadcast %0 : f32 to vector<1x256xf32>
    %4 = arith.mulf %3, %2 : vector<1x256xf32>
    %c0_4 = arith.constant 0 : index
    %c1 = arith.constant 1 : index
    %5 = memref.load %arg2[%c0_4, %c1] : memref<1x4xf32, #tpu.memory_space<smem>>
    %c0_5 = arith.constant 0 : index
    %c1_6 = arith.constant 1 : index
    %c0_7 = arith.constant 0 : index
    %6 = vector.load %arg3[%c0_5, %c1_6, %c0_7] : memref<1x4x256xf32, #tpu.memory_space<vmem>>, vector<1x1x256xf32>
    %7 = vector.shape_cast %6 : vector<1x1x256xf32> to vector<1x256xf32>
    %8 = vector.broadcast %5 : f32 to vector<1x256xf32>
    %9 = arith.mulf %8, %7 : vector<1x256xf32>
    %10 = arith.addf %4, %9 : vector<1x256xf32>
    %c0_8 = arith.constant 0 : index
    %c2 = arith.constant 2 : index
    %11 = memref.load %arg2[%c0_8, %c2] : memref<1x4xf32, #tpu.memory_space<smem>>
    %c0_9 = arith.constant 0 : index
    %c2_10 = arith.constant 2 : index
    %c0_11 = arith.constant 0 : index
    %12 = vector.load %arg3[%c0_9, %c2_10, %c0_11] : memref<1x4x256xf32, #tpu.memory_space<vmem>>, vector<1x1x256xf32>
    %13 = vector.shape_cast %12 : vector<1x1x256xf32> to vector<1x256xf32>
    %14 = vector.broadcast %11 : f32 to vector<1x256xf32>
    %15 = arith.mulf %14, %13 : vector<1x256xf32>
    %16 = arith.addf %10, %15 : vector<1x256xf32>
    %c0_12 = arith.constant 0 : index
    %c3 = arith.constant 3 : index
    %17 = memref.load %arg2[%c0_12, %c3] : memref<1x4xf32, #tpu.memory_space<smem>>
    %c0_13 = arith.constant 0 : index
    %c3_14 = arith.constant 3 : index
    %c0_15 = arith.constant 0 : index
    %18 = vector.load %arg3[%c0_13, %c3_14, %c0_15] : memref<1x4x256xf32, #tpu.memory_space<vmem>>, vector<1x1x256xf32>
    %19 = vector.shape_cast %18 : vector<1x1x256xf32> to vector<1x256xf32>
    %20 = vector.broadcast %17 : f32 to vector<1x256xf32>
    %21 = arith.mulf %20, %19 : vector<1x256xf32>
    %22 = arith.addf %16, %21 : vector<1x256xf32>
    %23 = arith.negf %22 : vector<1x256xf32>
    %24 = math.exp %23 : vector<1x256xf32>
    %cst = arith.constant 1.000000e+00 : f32
    %25 = vector.broadcast %cst : f32 to vector<1x256xf32>
    %26 = arith.addf %25, %24 : vector<1x256xf32>
    %27 = arith.divf %25, %26 : vector<1x256xf32>
    %c0_16 = arith.constant 0 : index
    %c0_17 = arith.constant 0 : index
    %c0_18 = arith.constant 0 : index
    %28 = vector.load %arg4[%c0_16, %c0_17, %c0_18] : memref<1x1x256xf32, #tpu.memory_space<vmem>>, vector<1x1x256xf32>
    %29 = vector.shape_cast %28 : vector<1x1x256xf32> to vector<1x256xf32>
    %30 = vector.shape_cast %27 : vector<1x256xf32> to vector<1x1x256xf32>
    tpu.vector_store %arg4[%c0_16, %c0_17, %c0_18], %30 {strides = array<i32>} : memref<1x1x256xf32, #tpu.memory_space<vmem>>, vector<1x1x256xf32>,
    return
  }
  func.func @transform_0(%arg0: i32, %arg1: i32) -> (i32, i32) {
    %c0_i32 = arith.constant 0 : i32
    %c0_i32_0 = arith.constant 0 : i32
    %c0_i32_1 = arith.constant 0 : i32
    return %c0_i32, %c0_i32_0 : i32, i32
  }
  func.func @transform_1(%arg0: i32, %arg1: i32) -> (i32, i32, i32) {
    %c0_i32 = arith.constant 0 : i32
    %c0_i32_0 = arith.constant 0 : i32
    return %arg0, %c0_i32, %arg1 : i32, i32, i32
  }
  func.func @transform_2(%arg0: i32, %arg1: i32) -> (i32, i32, i32) {
    %c0_i32 = arith.constant 0 : i32
    %c0_i32_0 = arith.constant 0 : i32
    return %arg0, %c0_i32, %arg1 : i32, i32, i32
  }
}

</mosaic_0001>

<llo_original>
// kernel: tpu_custom_call.1
$region0: #{tpu_custom_call.1}
  #allocation0 [shape = 'u32[]', space=smem, size = 0x4, offset = 0x4, fixed_abs, tag = 'smem constant byte address 0x4 - core index']
  #allocation1 [shape = 'u32[144,128]{1,0:T(1,128)}', space=vmem, size = 0x12000, scoped, tag = 'internal scratch']
  %s0 = inlined_call_operand.hbm [shape: f32[1,4], index: 0, kind: input, shape index: {}]
  %s1 = inlined_call_operand.hbm [shape: f32[2,4,256], index: 1, kind: input, shape index: {}]
  %s2 = inlined_call_operand.hbm [shape: f32[2,1,256], index: 2, kind: output, shape index: {}]
  %s3 = sld [smem:[#allocation0]]
  $region49: #{tpu_custom_call.1} parent=0
    _
  %s5 = ssub.s32 1, %s3
  %s6 = scalar_select 0, %s5, %s3
  $region1: #{tpu_custom_call.1} parent=0
    #allocation2 [shape = 'u8[512]{0}', space=smem, size = 0x200, scoped, tag = 'input window, operand 0, single buffered']
    #allocation3 [shape = 's32[2]{0}', space=sflag, size = 0x8, scoped, tag = 'scoped memory for tpu_custom_call.1']
    #allocation4 [shape = 's32[2]{0}', space=sflag, size = 0x8, scoped, tag = 'scoped memory for tpu_custom_call.1']
    #allocation5 [shape = 's32[2]{0}', space=sflag, size = 0x8, scoped, tag = 'scoped memory for tpu_custom_call.1']
    #allocation6 [shape = 'u8[8192]{0}', space=vmem, size = 0x2000, scoped, tag = 'input window, operand 1']
    #allocation7 [shape = 'u8[2048]{0}', space=vmem, size = 0x800, scoped, tag = 'output window, operand 0']
    %7 = vsyncpa [#allocation5], 0
    %8 = vsyncpa [#allocation3], 0
    %s9 = scalar_lea.sflag [#allocation3], 1
    %10 = vsyncpa %s9, 0
    %11 = vsyncpa [#allocation4], 0
    %s12 = scalar_lea.sflag [#allocation4], 1
    %13 = vsyncpa %s12, 0
    loop: start=0, step=1, limit=4
    $region2: #{tpu_custom_call.1} parent=1 // loop_pre_header
      _
    $region3: #{tpu_custom_call.1} parent=1 // loop_header
      %s15 = sphi 0, %s19
      %p16 = scmp.ge.s32.totalorder %s15, 4
      %s22 = sphi 0, %s34
      %s23 = sphi 0, %s30
      %s24 = sphi 0, %s22
      %s25 = sphi 0, %s23
      %s26 = sphi 0, %s24
      %s27 = sphi 0, %s25
      %s35 = sphi 0, %s35
      %s37 = sphi 0, %s35
      %s38 = sphi 0, %s37
      %s52 = sphi 0, %s38
      %s60 = sphi 0, %s62
      %s63 = sphi 0, %s60
      %s64 = sphi 0, %s63
      %s80 = sphi 0, %s64
      %s88 = sphi 0, %s90
      %s91 = sphi 0, %s88
      %s92 = sphi 0, %s91
      %s108 = sphi 0, %s92
    $region4: #{tpu_custom_call.1} parent=1 // loop_header_branch
      %18 = sbr.rel (%p16) target = $region8
    $region5: #{tpu_custom_call.1} parent=1 // loop_body
      %s20 = ssub.s32 %s15, 1
      %s21 = ssub.s32 %s15, 2
      %s28 = sadd.s32 1, %s23
      %p29 = scmp.ge.s32.totalorder %s28, 1
      %s30 = scalar_select %p29, 0, %s28
      %s31 = sadd.s32 1, %s22
      %s32 = scalar_select %p29, %s31, %s22
      %p33 = scmp.ge.s32.totalorder %s32, 2
      %s34 = scalar_select %p33, 0, %s32
      %s36 = sadd.s32 %s35, 1
      %p39 = scmp.eq.s32.totalorder %s15, 1
      %p40 = scmp.ne.s32.totalorder %s35, %s37
      %p41 = scmp.eq.s32.totalorder %s15, 0
      %p42 = por %p40, %p41
      %p43 = scmp.ne.s32.totalorder %s35, %s37
      %p44 = scmp.eq.s32.totalorder %s20, 1
      %p45 = por %p43, %p44
      %p46 = scmp.ne.s32.totalorder %s37, %s38
      %p47 = scmp.eq.s32.totalorder %s20, 0
      %p48 = por %p46, %p47
      %p49 = scmp.ne.s32.totalorder %s37, %s38
      %p50 = scmp.eq.s32.totalorder %s21, 1
      %p51 = por %p49, %p50
      %p53 = scmp.ne.s32.totalorder %s38, %s52
      %p54 = scmp.eq.s32.totalorder %s21, 0
      %p55 = por %p53, %p54
      %s56 = ssub.s32 %s22, %s34
      %s57 = ssub.s32 %s23, %s30
      %s58 = sor.u32 %s56, %s57
      %p59 = scmp.eq.s32.totalorder %s58, 0
      %s61 = sadd.s32 %s60, 1
      %s62 = scalar_select %p59, %s60, %s61
      %p65 = pneg %p59
      %p66 = scmp.eq.s32.totalorder %s15, 1
      %p67 = por %p65, %p66
      %p68 = scmp.ne.s32.totalorder %s60, %s63
      %p69 = scmp.eq.s32.totalorder %s15, 0
      %p70 = por %p68, %p69
      %p71 = scmp.ne.s32.totalorder %s60, %s63
      %p72 = scmp.eq.s32.totalorder %s20, 1
      %p73 = por %p71, %p72
      %p74 = scmp.ne.s32.totalorder %s63, %s64
      %p75 = scmp.eq.s32.totalorder %s20, 0
      %p76 = por %p74, %p75
      %p77 = scmp.ne.s32.totalorder %s63, %s64
      %p78 = scmp.eq.s32.totalorder %s21, 1
      %p79 = por %p77, %p78
      %p81 = scmp.ne.s32.totalorder %s64, %s80
      %p82 = scmp.eq.s32.totalorder %s21, 0
      %p83 = por %p81, %p82
      %s84 = ssub.s32 %s22, %s34
      %s85 = ssub.s32 %s23, %s30
      %s86 = sor.u32 %s84, %s85
      %p87 = scmp.eq.s32.totalorder %s86, 0
      %s89 = sadd.s32 %s88, 1
      %s90 = scalar_select %p87, %s88, %s89
      %p93 = pneg %p87
      %p94 = scmp.eq.s32.totalorder %s15, 1
      %p95 = por %p93, %p94
      %p96 = scmp.ne.s32.totalorder %s88, %s91
      %p97 = scmp.eq.s32.totalorder %s15, 0
      %p98 = por %p96, %p97
      %p99 = scmp.ne.s32.totalorder %s88, %s91
      %p100 = scmp.eq.s32.totalorder %s20, 1
      %p101 = por %p99, %p100
      %p102 = scmp.ne.s32.totalorder %s91, %s92
      %p103 = scmp.eq.s32.totalorder %s20, 0
      %p104 = por %p102, %p103
      %p105 = scmp.ne.s32.totalorder %s91, %s92
      %p106 = scmp.eq.s32.totalorder %s21, 1
      %p107 = por %p105, %p106
      %p109 = scmp.ne.s32.totalorder %s92, %s108
      %p110 = scmp.eq.s32.totalorder %s21, 0
      %p111 = por %p109, %p110
      %p112 = scmp.le.s32.totalorder 1, %s15
      %p113 = scmp.lt.s32.totalorder %s15, 3
      %p114 = pnand %p112, %p113
      %p115 = pneg %p114
      // Predicated region
      $region9: #{tpu_custom_call.1} parent=5 // pred_check
        _
      $region10: #{tpu_custom_call.1} parent=5 // pred_check_branch
        %117 = sbr.rel (%p114) target = $region12
      $region11: #{tpu_custom_call.1} parent=5 // pred_region
        %s118 = ssub.s32 %s15, 1
        // Predicated region
        $region13: #{tpu_custom_call.1} parent=11 // pred_check
          %p119 = pneg %p48
        $region14: #{tpu_custom_call.1} parent=11 // pred_check_branch
          %121 = sbr.rel (%p119) target = $region16
        $region15: #{tpu_custom_call.1} parent=11 // pred_region
          %s123 = ssub.s32 16, 16
          %124 = vsyncadd [#allocation5], %s123
          %127 = dma.hbm_to_smem %s0, 16, [#allocation2], [#allocation5]
        $region16: #{tpu_custom_call.1} parent=11 // pred_fallthru
          _
      $region12: #{tpu_custom_call.1} parent=5 // pred_fallthru
        _
      %p128 = scmp.lt.s32.totalorder %s15, 2
      // Predicated region
      $region17: #{tpu_custom_call.1} parent=5 // pred_check
        %p129 = pneg %p128
      $region18: #{tpu_custom_call.1} parent=5 // pred_check_branch
        %131 = sbr.rel (%p129) target = $region20
      $region19: #{tpu_custom_call.1} parent=5 // pred_region
        // Predicated region
        $region21: #{tpu_custom_call.1} parent=19 // pred_check
          %p132 = pneg %p70
        $region22: #{tpu_custom_call.1} parent=19 // pred_check_branch
          %134 = sbr.rel (%p132) target = $region24
        $region23: #{tpu_custom_call.1} parent=19 // pred_region
          %s135 = sand.u32 %s60, 1
          %s136 = scalar_lea.sflag [#allocation3], %s135
          %s137 = sand.u32 %s60, 1
          %s138 = smul.addr %s137, 8
          %s139 = scalar_lea.vmem [#allocation6], %s138
          %s140 = smul.u32 2, %s23
          %s142 = ssub.s32 128, 128
          %143 = vsyncadd %s136, %s142
          %s144 = smul.addr %s22, 2
          %s145 = sadd.s32 %s140, %s144
          %s146 = smul.addr %s145, 64
          %s147 = scalar_lea.hbm %s1, %s146
          %s149 = sshll.u32 %s139, 4
          %s150 = int_to_ptr.vmem [resolvable:$true] %s149
          %152 = dma.hbm_to_vmem [thread:$0]  %s147, 128, %s150, %s136
        $region24: #{tpu_custom_call.1} parent=19 // pred_fallthru
          _
      $region20: #{tpu_custom_call.1} parent=5 // pred_fallthru
        _
      %p153 = scmp.le.s32.totalorder 1, %s15
      %p154 = scmp.lt.s32.totalorder %s15, 3
      %p155 = pnand %p153, %p154
      %p156 = pneg %p155
      // Predicated region
      $region25: #{tpu_custom_call.1} parent=5 // pred_check
        _
      $region26: #{tpu_custom_call.1} parent=5 // pred_check_branch
        %158 = sbr.rel (%p155) target = $region28
      $region27: #{tpu_custom_call.1} parent=5 // pred_region
        %s159 = ssub.s32 %s15, 1
        // Predicated region
        $region29: #{tpu_custom_call.1} parent=27 // pred_check
          %p160 = pneg %p48
        $region30: #{tpu_custom_call.1} parent=27 // pred_check_branch
          %162 = sbr.rel (%p160) target = $region32
        $region31: #{tpu_custom_call.1} parent=27 // pred_region
          %163 = dma.done [#allocation5], 16
        $region32: #{tpu_custom_call.1} parent=27 // pred_fallthru
          _
        %s164 = sand.u32 %s63, 1
        %s165 = scalar_lea.sflag [#allocation3], %s164
        %s166 = sand.u32 %s63, 1
        %s167 = smul.addr %s166, 8
        %s168 = scalar_lea.vmem [#allocation6], %s167
        // Predicated region
        $region33: #{tpu_custom_call.1} parent=27 // pred_check
          %p169 = pneg %p76
        $region34: #{tpu_custom_call.1} parent=27 // pred_check_branch
          %171 = sbr.rel (%p169) target = $region36
        $region35: #{tpu_custom_call.1} parent=27 // pred_region
          %172 = dma.done %s165, 128
        $region36: #{tpu_custom_call.1} parent=27 // pred_fallthru
          _
        %173 = sfence
        %p174 = pneg %p48
        %p175 = pneg %p45
        %s176 = sand.u32 %s63, 1
        %s177 = scalar_lea.sflag [#allocation3], %s176
        %s178 = sand.u32 %s63, 1
        %s179 = smul.addr %s178, 8
        %s180 = scalar_lea.vmem [#allocation6], %s179
        %p181 = pneg %p76
        %p182 = pneg %p73
        %p183 = pneg %p104
        %p184 = pneg %p101
        %s185 = sand.u32 %s91, 1
        %s186 = scalar_lea.sflag [#allocation4], %s185
        %s187 = sand.u32 %s91, 1
        %s188 = smul.addr %s187, 2
        %s189 = scalar_lea.vmem [#allocation7], %s188
        %s190 = smul.u32 2, %s25
        %s191 = smul.u32 2, %s25
        %s192 = sld [smem:[#allocation2]]
        %v193 = vld [vmem:[%s168] ss:$4 sm:$0x3]
        %v194 = vstv %s192
        %v195 = vmul.f32 %v194, %v193
        %s196 = sld [smem:[#allocation2 + $0x1]]
        %s197 = scalar_lea.vmem %s168, 1 [#allocation6]
        %v198 = vld [vmem:[%s197] ss:$4 sm:$0x3]
        %v199 = vstv %s196
        %v200 = vmul.f32 %v199, %v198
        %v201 = vadd.f32 %v195, %v200
        %s202 = sld [smem:[#allocation2 + $0x2]]
        %s203 = scalar_lea.vmem %s168, 2 [#allocation6]
        %v204 = vld [vmem:[%s203] ss:$4 sm:$0x3]
        %v205 = vstv %s202
        %v206 = vmul.f32 %v205, %v204
        %v207 = vadd.f32 %v201, %v206
        %s208 = sld [smem:[#allocation2 + $0x3]]
        %s209 = scalar_lea.vmem %s168, 3 [#allocation6]
        %v210 = vld [vmem:[%s209] ss:$4 sm:$0x3]
        %v211 = vstv %s208
        %v212 = vmul.f32 %v211, %v210
        %v213 = vadd.f32 %v207, %v212
        %v214 = vxor.u32 %v213, 2147483648
        %v215 = vmul.f32 %v214, 1.442695
        %v216 = vpow.pop %v215
        %v217 = vadd.f32 %v216, 1.0
        %v218 = vrcp.pop %v217
        %v219 = vmul.f32 1.0, %v218
        %v220 = vlaneseq
        %vm221 = vcmp.ge.s32.totalorder %v220, 0
        %vm222 = vcmp.lt.s32.totalorder %v220, 256
        %vm223 = vmand %vm221, %vm222
        %224 = vst.msk [vmem:[%s189] sm:$0x3] %vm223, %v219
        %s225 = sand.u32 %s91, 1
        %s226 = scalar_lea.sflag [#allocation4], %s225
        %s227 = sand.u32 %s91, 1
        %s228 = smul.addr %s227, 2
        %s229 = scalar_lea.vmem [#allocation7], %s228
        // Predicated region
        $region37: #{tpu_custom_call.1} parent=27 // pred_check
          %p230 = pneg %p101
        $region38: #{tpu_custom_call.1} parent=27 // pred_check_branch
          %232 = sbr.rel (%p230) target = $region40
        $region39: #{tpu_custom_call.1} parent=27 // pred_region
          %s233 = smul.u32 2, %s25
          %s235 = ssub.s32 32, 32
          %236 = vsyncadd %s226, %s235
          %s237 = smul.addr %s24, 2
          %s238 = sadd.s32 %s233, %s237
          %s239 = smul.addr %s238, 16
          %s240 = scalar_lea.hbm %s2, %s239
          %s242 = sshll.u32 %s229, 4
          %s243 = int_to_ptr.vmem [resolvable:$true] %s242
          %245 = dma.vmem_to_hbm [thread:$0]  %s243, 32, %s240, %s226
        $region40: #{tpu_custom_call.1} parent=27 // pred_fallthru
          _
      $region28: #{tpu_custom_call.1} parent=5 // pred_fallthru
        _
      %p246 = scmp.le.s32.totalorder 2, %s15
      // Predicated region
      $region41: #{tpu_custom_call.1} parent=5 // pred_check
        %p247 = pneg %p246
      $region42: #{tpu_custom_call.1} parent=5 // pred_check_branch
        %249 = sbr.rel (%p247) target = $region44
      $region43: #{tpu_custom_call.1} parent=5 // pred_region
        %s250 = ssub.s32 %s15, 2
        // Predicated region
        $region45: #{tpu_custom_call.1} parent=43 // pred_check
          %p251 = pneg %p107
        $region46: #{tpu_custom_call.1} parent=43 // pred_check_branch
          %253 = sbr.rel (%p251) target = $region48
        $region47: #{tpu_custom_call.1} parent=43 // pred_region
          %s254 = sand.u32 %s92, 1
          %s255 = scalar_lea.sflag [#allocation4], %s254
          %s256 = sand.u32 %s92, 1
          %s257 = smul.addr %s256, 2
          %s258 = scalar_lea.vmem [#allocation7], %s257
          %259 = dma.done %s255, 32
        $region48: #{tpu_custom_call.1} parent=43 // pred_fallthru
          _
      $region44: #{tpu_custom_call.1} parent=5 // pred_fallthru
        _
    $region6: #{tpu_custom_call.1} parent=1 // loop_footer
      %s19 = sadd.s32 1, %s15
    $region7: #{tpu_custom_call.1} parent=1 // loop_footer_branch
      %14 = sbr.rel target = $region3
    $region8: #{tpu_custom_call.1} parent=1 // loop_exit
      _
    %260 = vsyncpa [#allocation3], 1
    %s261 = scalar_lea.sflag [#allocation3], 1
    %262 = vsyncpa %s261, 1
    %263 = vsyncpa [#allocation4], 1
    %s264 = scalar_lea.sflag [#allocation4], 1
    %265 = vsyncpa %s264, 1
    %266 = vsyncpa [#allocation5], 1
    %s267 = scalar_lea.sflag [#allocation5], 1
    %268 = vsyncpa %s267, 1

</llo_original>
